<compile_context>
chip_gen: v5e
topology: v5e:2x2
jax: 0.10.0
libtpu: 0.0.40
codegen_flags: <defaults>
</compile_context>

<pallas_src>
import functools

import jax
import jax.numpy as jnp
from jax import lax
from jax.experimental import pallas as pl
from jax.experimental.pallas import tpu as pltpu

LANE = 128      # vreg lane width
SUBLANE = 8     # f32 sublanes per vreg
TM = 2048       # rows of the (m, 128) slab per grid step (1 MiB f32 / input)


def _jaccard_partial_kernel(logits_ref, tgt_ref, prod_ref, sum_ref,
                            *, total, needs_mask):
    """Per-block partial reduction for the Jaccard loss.

    logits_ref, tgt_ref : (tm, 128) input tiles in VMEM (native dtype)
    prod_ref            : (1, 8, 128) f32 partial of sum(pred * target)
    sum_ref             : (1, 8, 128) f32 partial of sum(pred) + sum(target)
    """
    i = pl.program_id(0)
    tm, lane = logits_ref.shape

    pred = jax.nn.sigmoid(logits_ref[...].astype(jnp.float32))
    t = tgt_ref[...].astype(jnp.float32)

    if needs_mask:
        # Mask elements past the true length (pad tail and/or rows of the last
        # block that extend past the array).
        row = lax.broadcasted_iota(jnp.int32, (tm, lane), 0)
        col = lax.broadcasted_iota(jnp.int32, (tm, lane), 1)
        flat = i * (tm * lane) + row * lane + col
        valid = flat < total
        pred = jnp.where(valid, pred, 0.0)
        t = jnp.where(valid, t, 0.0)

    # Sublane-aligned partial reduction: (tm, 128) -> (tm//8, 8, 128) -> (8, 128).
    # Pure strided VPU adds; the tiny cross-lane/global reduce over all the
    # (grid_n, 8, 128) partials happens once in the wrapper.
    pt = (pred * t).reshape(tm // SUBLANE, SUBLANE, lane)
    st = (pred + t).reshape(tm // SUBLANE, SUBLANE, lane)
    prod_ref[0] = jnp.sum(pt, axis=0)
    sum_ref[0] = jnp.sum(st, axis=0)


@jax.jit
def jaccard_loss(output, target):
    """JaccardLoss.forward(output, target) -> scalar f32."""
    assert output.shape == target.shape

    out_flat = output.reshape(-1)
    tgt_flat = target.reshape(-1)
    total = out_flat.shape[0]

    # Floating inputs stream in their native dtype (f32 / bf16) and are cast
    # inside the kernel; only bool / integer masks are cast up front.
    if not jnp.issubdtype(out_flat.dtype, jnp.floating):
        out_flat = out_flat.astype(jnp.float32)
    if not jnp.issubdtype(tgt_flat.dtype, jnp.floating):
        tgt_flat = tgt_flat.astype(jnp.float32)

    # Lane-dense (m, 128) slab with m a multiple of 8 (sublane aligned rows).
    chunk = SUBLANE * LANE
    rem = total % chunk
    if rem:
        pad = chunk - rem
        out_flat = jnp.pad(out_flat, (0, pad))
        tgt_flat = jnp.pad(tgt_flat, (0, pad))
    m = out_flat.shape[0] // LANE
    out2d = out_flat.reshape(m, LANE)
    tgt2d = tgt_flat.reshape(m, LANE)

    # Row-tile size: big enough to amortize the ~0.35us per-step overhead,
    # small enough to keep double-buffering inside scoped VMEM everywhere.
    # For small inputs the block simply equals the whole array.
    tm = m if m <= TM else TM
    grid_n = pl.cdiv(m, tm)
    needs_mask = (grid_n * tm * LANE) != total

    kernel = functools.partial(_jaccard_partial_kernel,
                               total=total, needs_mask=needs_mask)

    bytes_accessed = (out2d.size * out2d.dtype.itemsize
                      + tgt2d.size * tgt2d.dtype.itemsize
                      + 2 * grid_n * SUBLANE * LANE * 4)

    prod_part, sum_part = pl.pallas_call(
        kernel,
        out_shape=(
            jax.ShapeDtypeStruct((grid_n, SUBLANE, LANE), jnp.float32),
            jax.ShapeDtypeStruct((grid_n, SUBLANE, LANE), jnp.float32),
        ),
        grid_spec=pltpu.PrefetchScalarGridSpec(
            num_scalar_prefetch=0,
            grid=(grid_n,),
            in_specs=[
                pl.BlockSpec((tm, LANE), lambda i: (i, 0)),
                pl.BlockSpec((tm, LANE), lambda i: (i, 0)),
            ],
            out_specs=[
                pl.BlockSpec((1, SUBLANE, LANE), lambda i: (i, 0, 0)),
                pl.BlockSpec((1, SUBLANE, LANE), lambda i: (i, 0, 0)),
            ],
        ),
        compiler_params=pltpu.CompilerParams(
            # Fully independent per-block partials -> megacore sharding on v7x.
            dimension_semantics=("parallel",),
        ),
        cost_estimate=pl.CostEstimate(
            flops=5 * total, transcendentals=total,
            bytes_accessed=bytes_accessed),
    )(out2d, tgt2d)

    prod = jnp.sum(prod_part)          # sum(pred * target)
    s_pt = jnp.sum(sum_part)           # sum(pred) + sum(target)
    return 1.0 - 2.0 * (prod + 1.0) / (s_pt - prod + 1.0)


def _reference(output, target):
    pred = jax.nn.sigmoid(output.astype(jnp.float32))
    tgt = target.astype(jnp.float32)
    prod = jnp.sum(pred * tgt)
    return 1.0 - 2.0 * (prod + 1.0) / (jnp.sum(pred) + jnp.sum(tgt) - prod + 1.0)


if __name__ == "__main__":
    key = jax.random.PRNGKey(0)
    k1, k2, k3, k4 = jax.random.split(key, 4)

    # Primary test: NCHW, small shapes: batch=2, channels=4, spatial=16x16.
    output = jax.random.normal(k1, (2, 4, 16, 16), dtype=jnp.float32)
    target = (jax.random.uniform(k2, (2, 4, 16, 16)) > 0.5).astype(jnp.float32)

    loss = jaccard_loss(output, target)
    jax.block_until_ready(loss)
    ref = _reference(output, target)
    assert jnp.allclose(loss, ref, atol=1e-5, rtol=1e-5), (loss, ref)

    # Second test: odd (non-128-aligned) element count exercises the in-kernel mask.
    out_odd = jax.random.normal(k3, (3, 5, 7), dtype=jnp.float32)
    tgt_odd = (jax.random.uniform(k4, (3, 5, 7)) > 0.5).astype(jnp.float32)
    loss_odd = jaccard_loss(out_odd, tgt_odd)
    jax.block_until_ready(loss_odd)
    ref_odd = _reference(out_odd, tgt_odd)
    assert jnp.allclose(loss_odd, ref_odd, atol=1e-5, rtol=1e-5), (loss_odd, ref_odd)

    print("KERNEL_OK")
</pallas_src>

<mosaic_0001>
module attributes {stable_mosaic.version = 11 : i64} {
  func.func @_jaccard_partial_kernel(%arg0: i32, %arg1: memref<16x128xf32, #tpu.memory_space<vmem>>, %arg2: memref<16x128xf32, #tpu.memory_space<vmem>>, %arg3: memref<1x8x128xf32, #tpu.memory_space<vmem>>, %arg4: memref<1x8x128xf32, #tpu.memory_space<vmem>>) attributes {dimension_semantics = [#tpu.dimension_semantics<parallel>], iteration_bounds = array<i64: 1>, scalar_prefetch = 0 : i64, scratch_operands = 0 : i64, tpu.core_type = #tpu.core_type<tc>, window_params = [{transform_indices = @transform_0, window_bounds = array<i64: 16, 128>}, {transform_indices = @transform_1, window_bounds = array<i64: 16, 128>}, {transform_indices = @transform_2, window_bounds = array<i64: 1, 8, 128>}, {transform_indices = @transform_3, window_bounds = array<i64: 1, 8, 128>}]} {
    %c0 = arith.constant 0 : index
    %c0_0 = arith.constant 0 : index
    %0 = vector.load %arg1[%c0, %c0_0] : memref<16x128xf32, #tpu.memory_space<vmem>>, vector<16x128xf32>
    %1 = arith.negf %0 : vector<16x128xf32>
    %2 = math.exp %1 : vector<16x128xf32>
    %cst = arith.constant 1.000000e+00 : f32
    %3 = vector.broadcast %cst : f32 to vector<16x128xf32>
    %4 = arith.addf %3, %2 : vector<16x128xf32>
    %5 = arith.divf %3, %4 : vector<16x128xf32>
    %c0_1 = arith.constant 0 : index
    %c0_2 = arith.constant 0 : index
    %6 = vector.load %arg2[%c0_1, %c0_2] : memref<16x128xf32, #tpu.memory_space<vmem>>, vector<16x128xf32>
    %7 = arith.mulf %5, %6 : vector<16x128xf32>
    %8 = vector.shape_cast %7 : vector<16x128xf32> to vector<2x8x128xf32>
    %9 = arith.addf %5, %6 : vector<16x128xf32>
    %10 = vector.shape_cast %9 : vector<16x128xf32> to vector<2x8x128xf32>
    %cst_3 = arith.constant dense<0.000000e+00> : vector<8x128xf32>
    %11 = vector.multi_reduction <add>, %8, %cst_3 [0] : vector<2x8x128xf32> to vector<8x128xf32>
    %c0_4 = arith.constant 0 : index
    %c0_5 = arith.constant 0 : index
    %c0_6 = arith.constant 0 : index
    %12 = vector.load %arg3[%c0_4, %c0_5, %c0_6] : memref<1x8x128xf32, #tpu.memory_space<vmem>>, vector<1x8x128xf32>
    %13 = vector.shape_cast %12 : vector<1x8x128xf32> to vector<8x128xf32>
    %14 = vector.shape_cast %11 : vector<8x128xf32> to vector<1x8x128xf32>
    tpu.vector_store %arg3[%c0_4, %c0_5, %c0_6], %14 {strides = array<i32>} : memref<1x8x128xf32, #tpu.memory_space<vmem>>, vector<1x8x128xf32>,
    %cst_7 = arith.constant dense<0.000000e+00> : vector<8x128xf32>
    %15 = vector.multi_reduction <add>, %10, %cst_7 [0] : vector<2x8x128xf32> to vector<8x128xf32>
    %c0_8 = arith.constant 0 : index
    %c0_9 = arith.constant 0 : index
    %c0_10 = arith.constant 0 : index
    %16 = vector.load %arg4[%c0_8, %c0_9, %c0_10] : memref<1x8x128xf32, #tpu.memory_space<vmem>>, vector<1x8x128xf32>
    %17 = vector.shape_cast %16 : vector<1x8x128xf32> to vector<8x128xf32>
    %18 = vector.shape_cast %15 : vector<8x128xf32> to vector<1x8x128xf32>
    tpu.vector_store %arg4[%c0_8, %c0_9, %c0_10], %18 {strides = array<i32>} : memref<1x8x128xf32, #tpu.memory_space<vmem>>, vector<1x8x128xf32>,
    return
  }
  func.func @transform_0(%arg0: i32) -> (i32, i32) {
    %c0_i32 = arith.constant 0 : i32
    %c0_i32_0 = arith.constant 0 : i32
    return %arg0, %c0_i32 : i32, i32
  }
  func.func @transform_1(%arg0: i32) -> (i32, i32) {
    %c0_i32 = arith.constant 0 : i32
    %c0_i32_0 = arith.constant 0 : i32
    return %arg0, %c0_i32 : i32, i32
  }
  func.func @transform_2(%arg0: i32) -> (i32, i32, i32) {
    %c0_i32 = arith.constant 0 : i32
    %c0_i32_0 = arith.constant 0 : i32
    %c0_i32_1 = arith.constant 0 : i32
    return %arg0, %c0_i32, %c0_i32_0 : i32, i32, i32
  }
  func.func @transform_3(%arg0: i32) -> (i32, i32, i32) {
    %c0_i32 = arith.constant 0 : i32
    %c0_i32_0 = arith.constant 0 : i32
    %c0_i32_1 = arith.constant 0 : i32
    return %arg0, %c0_i32, %c0_i32_0 : i32, i32, i32
  }
}

</mosaic_0001>

<llo_original>
// kernel: jaccard_loss.1
$region0: #{jaccard_loss.1}
  #allocation0 [shape = 'u32[]', space=smem, size = 0x4, offset = 0x4, fixed_abs, tag = 'smem constant byte address 0x4 - core index']
  #allocation1 [shape = 'u32[72,128]{1,0:T(1,128)}', space=vmem, size = 0x9000, scoped, tag = 'internal scratch']
  %s0 = inlined_call_operand.vmem [shape: f32[16,128], index: 0, kind: input, shape index: {}]
  %s1 = inlined_call_operand.vmem [shape: f32[16,128], index: 1, kind: input, shape index: {}]
  %s2 = inlined_call_operand.vmem [shape: f32[1,8,128], index: 2, kind: output, shape index: {0}]
  %s3 = inlined_call_operand.vmem [shape: f32[1,8,128], index: 3, kind: output, shape index: {1}]
  %4 = xla_tuple %s2, %s3
  %s5 = sld [smem:[#allocation0]]
  $region26: #{jaccard_loss.1} parent=0
    _
  %s7 = ssub.s32 1, %s5
  %s8 = scalar_select 0, %s7, %s5
  // Predicated region
  $region2: #{jaccard_loss.1} parent=0 // pred_check
    _
  $region3: #{jaccard_loss.1} parent=0 // pred_check_branch
    %10 = sbr.rel (0) target = $region5
  $region4: #{jaccard_loss.1} parent=0 // pred_region
    _
  $region5: #{jaccard_loss.1} parent=0 // pred_fallthru
    _
  // Predicated region
  $region6: #{jaccard_loss.1} parent=0 // pred_check
    _
  $region7: #{jaccard_loss.1} parent=0 // pred_check_branch
    %12 = sbr.rel (0) target = $region9
  $region8: #{jaccard_loss.1} parent=0 // pred_region
    _
  $region9: #{jaccard_loss.1} parent=0 // pred_fallthru
    _
  %v13 = vld [vmem:[%s0] sm:$0xff]
  %v14 = vld [vmem:[%s0 + $0x8] sm:$0xff]
  %v15 = vxor.u32 %v13, 2147483648
  %v16 = vxor.u32 %v14, 2147483648
  %v17 = vmul.f32 %v15, 1.442695
  %v18 = vpow.pop %v17
  %v19 = vmul.f32 %v16, 1.442695
  %v20 = vpow.pop %v19
  %v21 = vadd.f32 %v18, 1.0
  %v22 = vadd.f32 %v20, 1.0
  %v23 = vrcp.pop %v21
  %v24 = vmul.f32 %v21, %v23
  %v25 = vsub.f32 1.0, %v24
  %v26 = vmul.f32 %v23, %v25
  %v27 = vadd.f32 %v23, %v26
  %vm28 = vweird.f32 %v21
  %vm29 = vweird.f32 %v23
  %vm30 = vmor %vm28, %vm29
  %v31 = vsel %vm30, %v23, %v27
  %v32 = vand.u32 2147483647, %v21
  %vm33 = vcmp.eq.f32.partialorder %v32, 8.507059e+37
  %v34 = vand.u32 %v21, 2147483648
  %v35 = vor.u32 1.1754944e-38, %v34
  %v36 = vsel %vm33, %v35, %v31
  %v37 = vmul.f32 1.0, %v36
  %v38 = vrcp.pop %v22
  %v39 = vmul.f32 %v22, %v38
  %v40 = vsub.f32 1.0, %v39
  %v41 = vmul.f32 %v38, %v40
  %v42 = vadd.f32 %v38, %v41
  %vm43 = vweird.f32 %v22
  %vm44 = vweird.f32 %v38
  %vm45 = vmor %vm43, %vm44
  %v46 = vsel %vm45, %v38, %v42
  %v47 = vand.u32 2147483647, %v22
  %vm48 = vcmp.eq.f32.partialorder %v47, 8.507059e+37
  %v49 = vand.u32 %v22, 2147483648
  %v50 = vor.u32 1.1754944e-38, %v49
  %v51 = vsel %vm48, %v50, %v46
  %v52 = vmul.f32 1.0, %v51
  %v53 = vld [vmem:[%s1] sm:$0xff]
  %v54 = vld [vmem:[%s1 + $0x8] sm:$0xff]
  %v55 = vmul.f32 %v37, %v53
  %v56 = vmul.f32 %v52, %v54
  %v57 = vadd.f32 %v37, %v53
  %v58 = vadd.f32 %v52, %v54
  %v59 = vadd.f32 %v55, %v56
  %60 = vst [vmem:[%s2] sm:$0xff] %v59
  %v61 = vadd.f32 %v57, %v58
  %62 = vst [vmem:[%s3] sm:$0xff] %v61
  // Predicated region
  $region10: #{jaccard_loss.1} parent=0 // pred_check
    _
  $region11: #{jaccard_loss.1} parent=0 // pred_check_branch
    %64 = sbr.rel (0) target = $region13
  $region12: #{jaccard_loss.1} parent=0 // pred_region
    _
  $region13: #{jaccard_loss.1} parent=0 // pred_fallthru
    _
  // Predicated region
  $region14: #{jaccard_loss.1} parent=0 // pred_check
    _
  $region15: #{jaccard_loss.1} parent=0 // pred_check_branch
    %66 = sbr.rel (0) target = $region17
  $region16: #{jaccard_loss.1} parent=0 // pred_region
    _
  $region17: #{jaccard_loss.1} parent=0 // pred_fallthru
    _
  // Predicated region
  $region18: #{jaccard_loss.1} parent=0 // pred_check
    _
  $region19: #{jaccard_loss.1} parent=0 // pred_check_branch
    %68 = sbr.rel (0) target = $region21
  $region20: #{jaccard_loss.1} parent=0 // pred_region
    _
  $region21: #{jaccard_loss.1} parent=0 // pred_fallthru
    _
  // Predicated region
  $region22: #{jaccard_loss.1} parent=0 // pred_check
    _
  $region23: #{jaccard_loss.1} parent=0 // pred_check_branch
    %70 = sbr.rel (0) target = $region25
  $region24: #{jaccard_loss.1} parent=0 // pred_region
    _
  $region25: #{jaccard_loss.1} parent=0 // pred_fallthru
    _

</llo_original>
